<compile_context>
chip_gen: v6e
topology: v6e:2x2x1
jax: 0.10.0
libtpu: 0.0.40
codegen_flags: <defaults>
</compile_context>

<pallas_src>
import functools

import jax
import jax.numpy as jnp
from jax.experimental import pallas as pl
from jax.experimental.pallas import tpu as pltpu

BN_EPS = 1e-5
LANE = 128
_HARD_MAX_TILE = 32768


def _round_up(v, m):
    return -(-v // m) * m


def _cdiv(a, b):
    return -(-a // b)


# ---------------------------------------------------------------------------
# Pallas kernel: full per-pixel MLP on a (channels, tile_spatial) block.
# ---------------------------------------------------------------------------
def make_fcnet_kernel(layer_meta, Cin, o_off, o_ch):
    """layer_meta: ((row_off, c_out), ...) per layer; last entry = output layer.

    Refs:
      x_ref  : (Cin,  tm) f32   o_ref  : (o_ch, tm) f32
      w_ref  : (R, K)    bf16   b_ref  : (R, 1)    f32
      out_ref: (Cout, tm) f32   act_ref: (K, tm)   bf16   (VMEM scratch)
    """
    num_layers = len(layer_meta)

    def kernel(x_ref, o_ref, w_ref, b_ref, out_ref, act_ref):
        tm = x_ref.shape[-1]
        # Build the [x ; 0-pad ; o] activation buffer once per grid step
        # (in-kernel f32->bf16 cast rides free VPU slack).
        x_bf = x_ref[...].astype(jnp.bfloat16)
        o_bf = o_ref[...].astype(jnp.bfloat16)
        pad = o_off - Cin
        if pad > 0:
            mid = jnp.zeros((pad, tm), jnp.bfloat16)
            act_ref[...] = jnp.concatenate([x_bf, mid, o_bf], axis=0)
        else:
            act_ref[...] = jnp.concatenate([x_bf, o_bf], axis=0)

        for li, (row_off, c_out) in enumerate(layer_meta):
            w = w_ref[row_off:row_off + c_out, :]          # (c_out, K) bf16
            b = b_ref[row_off:row_off + c_out, :]          # (c_out, 1) f32
            # Single merged matmul: skip-concat + BN are already folded into W'.
            z = jnp.dot(w, act_ref[...],
                        preferred_element_type=jnp.float32) + b
            if li < num_layers - 1:
                # ReLU; Dropout(rate=0.0) is the identity.  Only the hidden
                # rows of the activation buffer are overwritten; `o` rows stay.
                act_ref[0:c_out, :] = jnp.maximum(z, 0.0).astype(jnp.bfloat16)
            else:
                out_ref[...] = z.astype(out_ref.dtype)

    return kernel


# ---------------------------------------------------------------------------
# VMEM-budgeted spatial tile selection.
# ---------------------------------------------------------------------------
def _vmem_capacity_bytes():
    try:
        info = pltpu.get_tpu_info()
        cap = getattr(info, "vmem_capacity_bytes", None)
        if cap:
            return int(cap)
    except Exception:
        pass
    return 64 << 20  # conservative fallback (v7x per-core VMEM)


def _pick_spatial_tile(N, S, Cin, o_ch, Cout, K, c_max, vmem_cap):
    # Per-lane VMEM bytes per grid step: double-buffered f32 in/out blocks,
    # bf16 activation scratch, and the widest f32 intermediate (with slack).
    bytes_per_lane = (2 * 4 * (Cin + o_ch + Cout)
                      + 2 * K
                      + 2 * 4 * c_max)
    budget = int(0.4 * vmem_cap)
    cap = max(LANE, min(_HARD_MAX_TILE, budget // bytes_per_lane))
    cap -= cap % LANE

    if S <= cap:
        tm = S
    else:
        tm = None
        for t in range(cap, LANE - 1, -LANE):   # prefer a divisor of S
            if S % t == 0:
                tm = t
                break
        if tm is None:
            tm = cap  # ragged last block; Pallas masks out-of-bounds lanes

    # v7x megacore: guarantee >= 2 grid steps so both TensorCores get work.
    if N * _cdiv(S, tm) < 2 and S >= 2 * LANE:
        tm = max(LANE, (S // 2) // LANE * LANE)
    return tm


# ---------------------------------------------------------------------------
# pallas_call wrapper (spatial axis on the 128-wide lane dimension).
# ---------------------------------------------------------------------------
@functools.partial(jax.jit,
                   static_argnames=("layer_meta", "Cin", "o_off", "o_ch",
                                    "Cout", "tm", "vmem_limit"))
def _fcnet_spatial(x3, o3, w_slab, b_slab, *, layer_meta, Cin, o_off, o_ch,
                   Cout, tm, vmem_limit):
    """x3: (N, Cin, S) f32, o3: (N, o_ch, S) f32 -> (N, Cout, S) f32."""
    N, _, S = x3.shape
    grid = (N, _cdiv(S, tm))
    K = o_off + o_ch

    in_specs = [
        pl.BlockSpec((None, Cin, tm), lambda n, s: (n, 0, s)),
        pl.BlockSpec((None, o_ch, tm), lambda n, s: (n, 0, s)),
        pl.BlockSpec(w_slab.shape, lambda n, s: (0, 0)),   # fetched once
        pl.BlockSpec(b_slab.shape, lambda n, s: (0, 0)),   # fetched once
    ]
    out_specs = pl.BlockSpec((None, Cout, tm), lambda n, s: (n, 0, s))

    # Advisory cost estimate for XLA scheduling around the custom call.
    M = N * S
    flops = sum(2 * M * K * c_out for _, c_out in layer_meta)
    bytes_accessed = (x3.size * 4 + o3.size * 4 + M * Cout * 4
                      + w_slab.size * 2 + b_slab.size * 4)

    return pl.pallas_call(
        make_fcnet_kernel(layer_meta, Cin, o_off, o_ch),
        out_shape=jax.ShapeDtypeStruct((N, Cout, S), jnp.float32),
        grid_spec=pltpu.PrefetchScalarGridSpec(
            num_scalar_prefetch=0,
            grid=grid,
            in_specs=in_specs,
            out_specs=out_specs,
            scratch_shapes=[pltpu.VMEM((K, tm), jnp.bfloat16)],
        ),
        compiler_params=pltpu.CompilerParams(
            dimension_semantics=("parallel", "parallel"),
            vmem_limit_bytes=int(vmem_limit)),
        cost_estimate=pl.CostEstimate(flops=int(flops), transcendentals=0,
                                      bytes_accessed=int(bytes_accessed)),
    )(x3, o3, w_slab, b_slab)


def fcnet_forward2d(x_nchw, o_nchw, kernel_params):
    """forward2d: NCHW in, NCHW out.  Only free reshapes on the wrapper side."""
    w_slab, b_slab, meta = kernel_params
    layer_meta, Cin, o_off, o_ch, Cout = meta
    N, C, Y, X = x_nchw.shape
    assert C == Cin
    S = Y * X
    K = o_off + o_ch
    c_max = max(c for _, c in layer_meta)
    vmem_cap = _vmem_capacity_bytes()
    tm = _pick_spatial_tile(N, S, Cin, o_ch, Cout, K, c_max, vmem_cap)
    vmem_limit = int(min(0.85 * vmem_cap, 96 << 20))

    x3 = x_nchw.reshape(N, Cin, S)                    # free reshape, stays f32
    o3 = o_nchw.reshape(N, o_ch, S)
    out3 = _fcnet_spatial(x3, o3, w_slab, b_slab,
                          layer_meta=layer_meta, Cin=Cin, o_off=o_off,
                          o_ch=o_ch, Cout=Cout, tm=tm, vmem_limit=vmem_limit)
    return out3.reshape(N, Cout, Y, X)


# ---------------------------------------------------------------------------
# Parameter construction (PyTorch-like) and host-side prep (merge + BN fold).
# ---------------------------------------------------------------------------
def make_torch_like_params(key, Cin, Cmiddle, Cout, o_channels):
    """Synthetic parameters mirroring the PyTorch module's layer shapes."""
    dims = [Cin] + list(Cmiddle)
    layers = []
    k = key
    for i in range(len(Cmiddle)):
        cin_tot = dims[i] + o_channels
        cout = dims[i + 1]
        k, kw, kb, kg, kbe, km, kv = jax.random.split(k, 7)
        layers.append(dict(
            W=0.1 * jax.random.normal(kw, (cout, cin_tot), jnp.float32),
            b=0.1 * jax.random.normal(kb, (cout,), jnp.float32),
            gamma=1.0 + 0.05 * jax.random.normal(kg, (cout,), jnp.float32),
            beta=0.05 * jax.random.normal(kbe, (cout,), jnp.float32),
            mean=0.05 * jax.random.normal(km, (cout,), jnp.float32),
            var=1.0 + 0.1 * jax.nn.softplus(
                jax.random.normal(kv, (cout,), jnp.float32)),
        ))
    k, kw, kb = jax.random.split(k, 3)
    layers.append(dict(
        W=0.1 * jax.random.normal(kw, (Cout, Cmiddle[-1] + o_channels), jnp.float32),
        b=0.1 * jax.random.normal(kb, (Cout,), jnp.float32),
    ))
    return layers


def prep_kernel_params(torch_layers, Cin, o_channels):
    """Fold eval-mode BN (f32), merge skip-concat into padded weight/bias slabs."""
    c_ins = [layer["W"].shape[1] - o_channels for layer in torch_layers]
    c_outs = [layer["W"].shape[0] for layer in torch_layers]
    C_max = max(c_ins)
    o_off = _round_up(C_max, 8)
    K = o_off + o_channels

    row_offs = []
    off = 0
    for c in c_outs:
        row_offs.append(off)
        off += _round_up(c, 8)
    R = off

    w_slab = jnp.zeros((R, K), jnp.float32)
    b_slab = jnp.zeros((R, 1), jnp.float32)
    for layer, c_in, c_out, r in zip(torch_layers, c_ins, c_outs, row_offs):
        W = layer["W"]
        b = layer["b"]
        if "gamma" in layer:  # fold eval-mode BatchNorm1d into the Linear
            scale = layer["gamma"] * jax.lax.rsqrt(layer["var"] + BN_EPS)
            W = W * scale[:, None]
            b = (b - layer["mean"]) * scale + layer["beta"]
        Wx, Wo = W[:, :c_in], W[:, c_in:]
        w_slab = w_slab.at[r:r + c_out, 0:c_in].set(Wx)
        w_slab = w_slab.at[r:r + c_out, o_off:o_off + o_channels].set(Wo)
        b_slab = b_slab.at[r:r + c_out, 0].set(b)

    layer_meta = tuple((int(r), int(c)) for r, c in zip(row_offs, c_outs))
    meta = (layer_meta, int(Cin), int(o_off), int(o_channels), int(c_outs[-1]))
    return w_slab.astype(jnp.bfloat16), b_slab, meta


# ---------------------------------------------------------------------------
# Pure-JAX f32 reference (unfolded params, explicit eval-mode BN).
# ---------------------------------------------------------------------------
def reference_forward2d(x_nchw, o_nchw, torch_layers):
    N, C, Y, X = x_nchw.shape
    x = jnp.transpose(x_nchw, (0, 2, 3, 1)).reshape(-1, C)
    o = jnp.transpose(o_nchw, (0, 2, 3, 1)).reshape(-1, o_nchw.shape[1])
    for layer in torch_layers[:-1]:
        z = jnp.concatenate([x, o], axis=-1) @ layer["W"].T + layer["b"]
        z = ((z - layer["mean"]) * jax.lax.rsqrt(layer["var"] + BN_EPS)
             * layer["gamma"] + layer["beta"])
        x = jnp.maximum(z, 0.0)
    last = torch_layers[-1]
    out = jnp.concatenate([x, o], axis=-1) @ last["W"].T + last["b"]
    Cout = out.shape[-1]
    return jnp.transpose(out.reshape(N, Y, X, Cout), (0, 3, 1, 2))


if __name__ == "__main__":
    # Module config: FCNetwork(Cin=4, Cmiddle=[32,32], Cout=3, dropout_rate=0.0,
    #                          skip_connections=True, o_channels=2), eval mode.
    Cin, Cmiddle, Cout, o_channels = 4, [32, 32], 3, 2
    N, Y, X = 2, 16, 16

    key = jax.random.PRNGKey(0)
    kx, ko, kp = jax.random.split(key, 3)
    x = jax.random.normal(kx, (N, Cin, Y, X), jnp.float32)
    o = jax.random.normal(ko, (N, o_channels, Y, X), jnp.float32)

    torch_layers = make_torch_like_params(kp, Cin, Cmiddle, Cout, o_channels)
    kernel_params = prep_kernel_params(torch_layers, Cin, o_channels)

    out = fcnet_forward2d(x, o, kernel_params)
    out = jax.block_until_ready(out)

    ref = reference_forward2d(x, o, torch_layers)
    assert out.shape == (N, Cout, Y, X), out.shape
    max_err = float(jnp.max(jnp.abs(out - ref)))
    # bf16 weights/activations in the kernel vs f32 reference.
    assert max_err < 5e-2, f"max abs err {max_err}"

    print("KERNEL_OK")
</pallas_src>

<mosaic_0001>
module attributes {stable_mosaic.version = 11 : i64} {
  func.func @kernel(%arg0: i32, %arg1: i32, %arg2: memref<1x4x256xf32, #tpu.memory_space<vmem>>, %arg3: memref<1x2x256xf32, #tpu.memory_space<vmem>>, %arg4: memref<72x34xbf16, #tpu.memory_space<vmem>>, %arg5: memref<72x1xf32, #tpu.memory_space<vmem>>, %arg6: memref<1x3x256xf32, #tpu.memory_space<vmem>>, %arg7: memref<34x256xbf16, #tpu.memory_space<vmem>>) attributes {dimension_semantics = [#tpu.dimension_semantics<parallel>, #tpu.dimension_semantics<parallel>], iteration_bounds = array<i64: 2, 1>, scalar_prefetch = 0 : i64, scratch_operands = 1 : i64, tpu.core_type = #tpu.core_type<tc>, window_params = [{transform_indices = @transform_0, window_bounds = array<i64: 1, 4, 256>}, {transform_indices = @transform_1, window_bounds = array<i64: 1, 2, 256>}, {pipeline_mode = #tpu.pipeline_mode<synchronous>, transform_indices = @transform_2, window_bounds = array<i64: 72, 34>}, {pipeline_mode = #tpu.pipeline_mode<synchronous>, transform_indices = @transform_3, window_bounds = array<i64: 72, 1>}, {transform_indices = @transform_4, window_bounds = array<i64: 1, 3, 256>}]} {
    %c0 = arith.constant 0 : index
    %c0_0 = arith.constant 0 : index
    %c0_1 = arith.constant 0 : index
    %0 = vector.load %arg2[%c0, %c0_0, %c0_1] : memref<1x4x256xf32, #tpu.memory_space<vmem>>, vector<1x4x256xf32>
    %1 = vector.shape_cast %0 : vector<1x4x256xf32> to vector<4x256xf32>
    %2 = arith.truncf %1 : vector<4x256xf32> to vector<4x256xbf16>
    %c0_2 = arith.constant 0 : index
    %c0_3 = arith.constant 0 : index
    %c0_4 = arith.constant 0 : index
    %3 = vector.load %arg3[%c0_2, %c0_3, %c0_4] : memref<1x2x256xf32, #tpu.memory_space<vmem>>, vector<1x2x256xf32>
    %4 = vector.shape_cast %3 : vector<1x2x256xf32> to vector<2x256xf32>
    %5 = arith.truncf %4 : vector<2x256xf32> to vector<2x256xbf16>
    %cst = arith.constant 0.000000e+00 : bf16
    %6 = vector.broadcast %cst : bf16 to vector<28x256xbf16>
    %7 = tpu.concatenate %2, %6, %5 in 0 : vector<4x256xbf16>, vector<28x256xbf16>, vector<2x256xbf16> -> vector<34x256xbf16>
    %c0_5 = arith.constant 0 : index
    %c0_6 = arith.constant 0 : index
    %8 = vector.load %arg7[%c0_5, %c0_6] : memref<34x256xbf16, #tpu.memory_space<vmem>>, vector<34x256xbf16>
    tpu.vector_store %arg7[%c0_5, %c0_6], %7 {strides = array<i32>} : memref<34x256xbf16, #tpu.memory_space<vmem>>, vector<34x256xbf16>,
    %c0_7 = arith.constant 0 : index
    %c0_8 = arith.constant 0 : index
    %9 = vector.load %arg4[%c0_7, %c0_8] : memref<72x34xbf16, #tpu.memory_space<vmem>>, vector<32x34xbf16>
    %c0_9 = arith.constant 0 : index
    %c0_10 = arith.constant 0 : index
    %10 = vector.load %arg5[%c0_9, %c0_10] : memref<72x1xf32, #tpu.memory_space<vmem>>, vector<32x1xf32>
    %c0_11 = arith.constant 0 : index
    %c0_12 = arith.constant 0 : index
    %11 = vector.load %arg7[%c0_11, %c0_12] : memref<34x256xbf16, #tpu.memory_space<vmem>>, vector<34x256xbf16>
    %cst_13 = arith.constant dense<0.000000e+00> : vector<32x256xf32>
    %12 = tpu.matmul %9, %11, %cst_13 {dimension_numbers = #tpu.dot_dimension_numbers<[1], [0], [0], [1], [0, 0, 1, 1], [], []>} : vector<32x34xbf16>, vector<34x256xbf16>, vector<32x256xf32> -> vector<32x256xf32>
    %13 = vector.broadcast %10 : vector<32x1xf32> to vector<32x256xf32>
    %14 = arith.addf %12, %13 : vector<32x256xf32>
    %cst_14 = arith.constant 0.000000e+00 : f32
    %15 = vector.broadcast %cst_14 : f32 to vector<32x256xf32>
    %16 = arith.maximumf %14, %15 : vector<32x256xf32>
    %17 = arith.truncf %16 : vector<32x256xf32> to vector<32x256xbf16>
    %c0_15 = arith.constant 0 : index
    %c0_16 = arith.constant 0 : index
    %18 = vector.load %arg7[%c0_15, %c0_16] : memref<34x256xbf16, #tpu.memory_space<vmem>>, vector<32x256xbf16>
    tpu.vector_store %arg7[%c0_15, %c0_16], %17 {strides = array<i32>} : memref<34x256xbf16, #tpu.memory_space<vmem>>, vector<32x256xbf16>,
    %c32 = arith.constant 32 : index
    %c0_17 = arith.constant 0 : index
    %19 = vector.load %arg4[%c32, %c0_17] : memref<72x34xbf16, #tpu.memory_space<vmem>>, vector<32x34xbf16>
    %c32_18 = arith.constant 32 : index
    %c0_19 = arith.constant 0 : index
    %20 = vector.load %arg5[%c32_18, %c0_19] : memref<72x1xf32, #tpu.memory_space<vmem>>, vector<32x1xf32>
    %c0_20 = arith.constant 0 : index
    %c0_21 = arith.constant 0 : index
    %21 = vector.load %arg7[%c0_20, %c0_21] : memref<34x256xbf16, #tpu.memory_space<vmem>>, vector<34x256xbf16>
    %cst_22 = arith.constant dense<0.000000e+00> : vector<32x256xf32>
    %22 = tpu.matmul %19, %21, %cst_22 {dimension_numbers = #tpu.dot_dimension_numbers<[1], [0], [0], [1], [0, 0, 1, 1], [], []>} : vector<32x34xbf16>, vector<34x256xbf16>, vector<32x256xf32> -> vector<32x256xf32>
    %23 = vector.broadcast %20 : vector<32x1xf32> to vector<32x256xf32>
    %24 = arith.addf %22, %23 : vector<32x256xf32>
    %cst_23 = arith.constant 0.000000e+00 : f32
    %25 = vector.broadcast %cst_23 : f32 to vector<32x256xf32>
    %26 = arith.maximumf %24, %25 : vector<32x256xf32>
    %27 = arith.truncf %26 : vector<32x256xf32> to vector<32x256xbf16>
    %c0_24 = arith.constant 0 : index
    %c0_25 = arith.constant 0 : index
    %28 = vector.load %arg7[%c0_24, %c0_25] : memref<34x256xbf16, #tpu.memory_space<vmem>>, vector<32x256xbf16>
    tpu.vector_store %arg7[%c0_24, %c0_25], %27 {strides = array<i32>} : memref<34x256xbf16, #tpu.memory_space<vmem>>, vector<32x256xbf16>,
    %c64 = arith.constant 64 : index
    %c0_26 = arith.constant 0 : index
    %29 = vector.load %arg4[%c64, %c0_26] : memref<72x34xbf16, #tpu.memory_space<vmem>>, vector<3x34xbf16>
    %c64_27 = arith.constant 64 : index
    %c0_28 = arith.constant 0 : index
    %30 = vector.load %arg5[%c64_27, %c0_28] : memref<72x1xf32, #tpu.memory_space<vmem>>, vector<3x1xf32>
    %c0_29 = arith.constant 0 : index
    %c0_30 = arith.constant 0 : index
    %31 = vector.load %arg7[%c0_29, %c0_30] : memref<34x256xbf16, #tpu.memory_space<vmem>>, vector<34x256xbf16>
    %cst_31 = arith.constant dense<0.000000e+00> : vector<3x256xf32>
    %32 = tpu.matmul %29, %31, %cst_31 {dimension_numbers = #tpu.dot_dimension_numbers<[1], [0], [0], [1], [0, 0, 1, 1], [], []>} : vector<3x34xbf16>, vector<34x256xbf16>, vector<3x256xf32> -> vector<3x256xf32>
    %33 = vector.broadcast %30 : vector<3x1xf32> to vector<3x256xf32>
    %34 = arith.addf %32, %33 : vector<3x256xf32>
    %c0_32 = arith.constant 0 : index
    %c0_33 = arith.constant 0 : index
    %c0_34 = arith.constant 0 : index
    %35 = vector.load %arg6[%c0_32, %c0_33, %c0_34] : memref<1x3x256xf32, #tpu.memory_space<vmem>>, vector<1x3x256xf32>
    %36 = vector.shape_cast %35 : vector<1x3x256xf32> to vector<3x256xf32>
    %37 = vector.shape_cast %34 : vector<3x256xf32> to vector<1x3x256xf32>
    tpu.vector_store %arg6[%c0_32, %c0_33, %c0_34], %37 {strides = array<i32>} : memref<1x3x256xf32, #tpu.memory_space<vmem>>, vector<1x3x256xf32>,
    return
  }
  func.func @transform_0(%arg0: i32, %arg1: i32) -> (i32, i32, i32) {
    %c0_i32 = arith.constant 0 : i32
    %c0_i32_0 = arith.constant 0 : i32
    return %arg0, %c0_i32, %arg1 : i32, i32, i32
  }
  func.func @transform_1(%arg0: i32, %arg1: i32) -> (i32, i32, i32) {
    %c0_i32 = arith.constant 0 : i32
    %c0_i32_0 = arith.constant 0 : i32
    return %arg0, %c0_i32, %arg1 : i32, i32, i32
  }
  func.func @transform_2(%arg0: i32, %arg1: i32) -> (i32, i32) {
    %c0_i32 = arith.constant 0 : i32
    %c0_i32_0 = arith.constant 0 : i32
    %c0_i32_1 = arith.constant 0 : i32
    return %c0_i32, %c0_i32_0 : i32, i32
  }
  func.func @transform_3(%arg0: i32, %arg1: i32) -> (i32, i32) {
    %c0_i32 = arith.constant 0 : i32
    %c0_i32_0 = arith.constant 0 : i32
    %c0_i32_1 = arith.constant 0 : i32
    return %c0_i32, %c0_i32_0 : i32, i32
  }
  func.func @transform_4(%arg0: i32, %arg1: i32) -> (i32, i32, i32) {
    %c0_i32 = arith.constant 0 : i32
    %c0_i32_0 = arith.constant 0 : i32
    return %arg0, %c0_i32, %arg1 : i32, i32, i32
  }
}

</mosaic_0001>

<llo_original>
// kernel: _fcnet_spatial.1
$region0: #{_fcnet_spatial.1}
  #allocation0 [shape = 'u32[]', space=smem, size = 0x4, offset = 0x4, fixed_abs, tag = 'smem constant byte address 0x4 - core index']
  #allocation1 [shape = 'u32[144,128]{1,0:T(1,128)}', space=vmem, size = 0x12000, scoped, tag = 'internal scratch']
  #allocation2 [shape = 'bf16[34,256]{1,0:T(8,128)(2,1)}', space=vmem, size = 0x5000, scoped, tag = 'scratch operand']
  %s0 = inlined_call_operand.vmem [shape: f32[2,4,256], index: 0, kind: input, shape index: {}]
  %s1 = inlined_call_operand.vmem [shape: f32[2,2,256], index: 1, kind: input, shape index: {}]
  %s2 = inlined_call_operand.vmem [shape: bf16[72,34], index: 2, kind: input, shape index: {}]
  %s3 = inlined_call_operand.vmem [shape: f32[72,1], index: 3, kind: input, shape index: {}]
  %s4 = inlined_call_operand.vmem [shape: f32[2,3,256], index: 4, kind: output, shape index: {}]
  %s5 = sld [smem:[#allocation0]]
  $region49: #{_fcnet_spatial.1} parent=0
    _
  %s7 = ssub.s32 1, %s5
  %s8 = scalar_select 0, %s7, %s5
  loop: start=0, step=1, limit=4
  $region2: #{_fcnet_spatial.1} parent=0 // loop_pre_header
    _
  $region3: #{_fcnet_spatial.1} parent=0 // loop_header
    %s10 = sphi 0, %s14
    %p11 = scmp.ge.s32.totalorder %s10, 4
    %s17 = sphi 0, %s29
    %s18 = sphi 0, %s25
    %s19 = sphi 0, %s17
    %s20 = sphi 0, %s18
    %s21 = sphi 0, %s19
    %s22 = sphi 0, %s20
    %s34 = sphi 0, %s36
    %s37 = sphi 0, %s34
    %s38 = sphi 0, %s37
    %s54 = sphi 0, %s38
    %s62 = sphi 0, %s64
    %s65 = sphi 0, %s62
    %s66 = sphi 0, %s65
    %s82 = sphi 0, %s66
    %s86 = sphi 0, %s86
    %s88 = sphi 0, %s86
    %s89 = sphi 0, %s88
    %s103 = sphi 0, %s89
    %s107 = sphi 0, %s107
    %s109 = sphi 0, %s107
    %s110 = sphi 0, %s109
    %s124 = sphi 0, %s110
    %s132 = sphi 0, %s134
    %s135 = sphi 0, %s132
    %s136 = sphi 0, %s135
    %s152 = sphi 0, %s136
  $region4: #{_fcnet_spatial.1} parent=0 // loop_header_branch
    %13 = sbr.rel (%p11) target = $region8
  $region5: #{_fcnet_spatial.1} parent=0 // loop_body
    %s15 = ssub.s32 %s10, 1
    %s16 = ssub.s32 %s10, 2
    %s23 = sadd.s32 1, %s18
    %p24 = scmp.ge.s32.totalorder %s23, 1
    %s25 = scalar_select %p24, 0, %s23
    %s26 = sadd.s32 1, %s17
    %s27 = scalar_select %p24, %s26, %s17
    %p28 = scmp.ge.s32.totalorder %s27, 2
    %s29 = scalar_select %p28, 0, %s27
    %s30 = ssub.s32 %s17, %s29
    %s31 = ssub.s32 %s18, %s25
    %s32 = sor.u32 %s30, %s31
    %p33 = scmp.eq.s32.totalorder %s32, 0
    %s35 = sadd.s32 %s34, 1
    %s36 = scalar_select %p33, %s34, %s35
    %p39 = pneg %p33
    %p40 = scmp.eq.s32.totalorder %s10, 1
    %p41 = por %p39, %p40
    %p42 = scmp.ne.s32.totalorder %s34, %s37
    %p43 = scmp.eq.s32.totalorder %s10, 0
    %p44 = por %p42, %p43
    %p45 = scmp.ne.s32.totalorder %s34, %s37
    %p46 = scmp.eq.s32.totalorder %s15, 1
    %p47 = por %p45, %p46
    %p48 = scmp.ne.s32.totalorder %s37, %s38
    %p49 = scmp.eq.s32.totalorder %s15, 0
    %p50 = por %p48, %p49
    %p51 = scmp.ne.s32.totalorder %s37, %s38
    %p52 = scmp.eq.s32.totalorder %s16, 1
    %p53 = por %p51, %p52
    %p55 = scmp.ne.s32.totalorder %s38, %s54
    %p56 = scmp.eq.s32.totalorder %s16, 0
    %p57 = por %p55, %p56
    %s58 = ssub.s32 %s17, %s29
    %s59 = ssub.s32 %s18, %s25
    %s60 = sor.u32 %s58, %s59
    %p61 = scmp.eq.s32.totalorder %s60, 0
    %s63 = sadd.s32 %s62, 1
    %s64 = scalar_select %p61, %s62, %s63
    %p67 = pneg %p61
    %p68 = scmp.eq.s32.totalorder %s10, 1
    %p69 = por %p67, %p68
    %p70 = scmp.ne.s32.totalorder %s62, %s65
    %p71 = scmp.eq.s32.totalorder %s10, 0
    %p72 = por %p70, %p71
    %p73 = scmp.ne.s32.totalorder %s62, %s65
    %p74 = scmp.eq.s32.totalorder %s15, 1
    %p75 = por %p73, %p74
    %p76 = scmp.ne.s32.totalorder %s65, %s66
    %p77 = scmp.eq.s32.totalorder %s15, 0
    %p78 = por %p76, %p77
    %p79 = scmp.ne.s32.totalorder %s65, %s66
    %p80 = scmp.eq.s32.totalorder %s16, 1
    %p81 = por %p79, %p80
    %p83 = scmp.ne.s32.totalorder %s66, %s82
    %p84 = scmp.eq.s32.totalorder %s16, 0
    %p85 = por %p83, %p84
    %s87 = sadd.s32 %s86, 1
    %p90 = scmp.eq.s32.totalorder %s10, 1
    %p91 = scmp.ne.s32.totalorder %s86, %s88
    %p92 = scmp.eq.s32.totalorder %s10, 0
    %p93 = por %p91, %p92
    %p94 = scmp.ne.s32.totalorder %s86, %s88
    %p95 = scmp.eq.s32.totalorder %s15, 1
    %p96 = por %p94, %p95
    %p97 = scmp.ne.s32.totalorder %s88, %s89
    %p98 = scmp.eq.s32.totalorder %s15, 0
    %p99 = por %p97, %p98
    %p100 = scmp.ne.s32.totalorder %s88, %s89
    %p101 = scmp.eq.s32.totalorder %s16, 1
    %p102 = por %p100, %p101
    %p104 = scmp.ne.s32.totalorder %s89, %s103
    %p105 = scmp.eq.s32.totalorder %s16, 0
    %p106 = por %p104, %p105
    %s108 = sadd.s32 %s107, 1
    %p111 = scmp.eq.s32.totalorder %s10, 1
    %p112 = scmp.ne.s32.totalorder %s107, %s109
    %p113 = scmp.eq.s32.totalorder %s10, 0
    %p114 = por %p112, %p113
    %p115 = scmp.ne.s32.totalorder %s107, %s109
    %p116 = scmp.eq.s32.totalorder %s15, 1
    %p117 = por %p115, %p116
    %p118 = scmp.ne.s32.totalorder %s109, %s110
    %p119 = scmp.eq.s32.totalorder %s15, 0
    %p120 = por %p118, %p119
    %p121 = scmp.ne.s32.totalorder %s109, %s110
    %p122 = scmp.eq.s32.totalorder %s16, 1
    %p123 = por %p121, %p122
    %p125 = scmp.ne.s32.totalorder %s110, %s124
    %p126 = scmp.eq.s32.totalorder %s16, 0
    %p127 = por %p125, %p126
    %s128 = ssub.s32 %s17, %s29
    %s129 = ssub.s32 %s18, %s25
    %s130 = sor.u32 %s128, %s129
    %p131 = scmp.eq.s32.totalorder %s130, 0
    %s133 = sadd.s32 %s132, 1
    %s134 = scalar_select %p131, %s132, %s133
    %p137 = pneg %p131
    %p138 = scmp.eq.s32.totalorder %s10, 1
    %p139 = por %p137, %p138
    %p140 = scmp.ne.s32.totalorder %s132, %s135
    %p141 = scmp.eq.s32.totalorder %s10, 0
    %p142 = por %p140, %p141
    %p143 = scmp.ne.s32.totalorder %s132, %s135
    %p144 = scmp.eq.s32.totalorder %s15, 1
    %p145 = por %p143, %p144
    %p146 = scmp.ne.s32.totalorder %s135, %s136
    %p147 = scmp.eq.s32.totalorder %s15, 0
    %p148 = por %p146, %p147
    %p149 = scmp.ne.s32.totalorder %s135, %s136
    %p150 = scmp.eq.s32.totalorder %s16, 1
    %p151 = por %p149, %p150
    %p153 = scmp.ne.s32.totalorder %s136, %s152
    %p154 = scmp.eq.s32.totalorder %s16, 0
    %p155 = por %p153, %p154
    %p156 = scmp.le.s32.totalorder 1, %s10
    %p157 = scmp.lt.s32.totalorder %s10, 3
    %p158 = pnand %p156, %p157
    %p159 = pneg %p158
    // Predicated region
    $region9: #{_fcnet_spatial.1} parent=5 // pred_check
      _
    $region10: #{_fcnet_spatial.1} parent=5 // pred_check_branch
      %161 = sbr.rel (%p158) target = $region12
    $region11: #{_fcnet_spatial.1} parent=5 // pred_region
      %s162 = ssub.s32 %s10, 1
      // Predicated region
      $region13: #{_fcnet_spatial.1} parent=11 // pred_check
        %p163 = pneg %p99
      $region14: #{_fcnet_spatial.1} parent=11 // pred_check_branch
        %165 = sbr.rel (%p163) target = $region16
      $region15: #{_fcnet_spatial.1} parent=11 // pred_region
        _
      $region16: #{_fcnet_spatial.1} parent=11 // pred_fallthru
        _
      // Predicated region
      $region17: #{_fcnet_spatial.1} parent=11 // pred_check
        %p166 = pneg %p120
      $region18: #{_fcnet_spatial.1} parent=11 // pred_check_branch
        %168 = sbr.rel (%p166) target = $region20
      $region19: #{_fcnet_spatial.1} parent=11 // pred_region
        _
      $region20: #{_fcnet_spatial.1} parent=11 // pred_fallthru
        _
    $region12: #{_fcnet_spatial.1} parent=5 // pred_fallthru
      _
    %p169 = scmp.lt.s32.totalorder %s10, 2
    // Predicated region
    $region21: #{_fcnet_spatial.1} parent=5 // pred_check
      %p170 = pneg %p169
    $region22: #{_fcnet_spatial.1} parent=5 // pred_check_branch
      %172 = sbr.rel (%p170) target = $region24
    $region23: #{_fcnet_spatial.1} parent=5 // pred_region
      // Predicated region
      $region25: #{_fcnet_spatial.1} parent=23 // pred_check
        %p173 = pneg %p44
      $region26: #{_fcnet_spatial.1} parent=23 // pred_check_branch
        %175 = sbr.rel (%p173) target = $region28
      $region27: #{_fcnet_spatial.1} parent=23 // pred_region
        %s176 = smul.u32 2, %s18
        %p177 = scmp.lt.s32.totalorder %s17, 1
        %s178 = scalar_select %p177, %s17, 1
        %p179 = scmp.lt.s32.totalorder %s176, 1
        %s180 = scalar_select %p179, %s176, 1
        %s181 = smul.addr %s178, 2
        %s182 = sadd.s32 %s180, %s181
        %s183 = smul.addr %s182, 4
        %s184 = scalar_lea.vmem %s0, %s183
        %s185 = smul.u32 2, %s18
      $region28: #{_fcnet_spatial.1} parent=23 // pred_fallthru
        _
      // Predicated region
      $region29: #{_fcnet_spatial.1} parent=23 // pred_check
        %p186 = pneg %p72
      $region30: #{_fcnet_spatial.1} parent=23 // pred_check_branch
        %188 = sbr.rel (%p186) target = $region32
      $region31: #{_fcnet_spatial.1} parent=23 // pred_region
        %s189 = smul.u32 2, %s18
        %p190 = scmp.lt.s32.totalorder %s17, 1
        %s191 = scalar_select %p190, %s17, 1
        %p192 = scmp.lt.s32.totalorder %s189, 1
        %s193 = scalar_select %p192, %s189, 1
        %s194 = smul.addr %s191, 2
        %s195 = sadd.s32 %s193, %s194
        %s196 = smul.addr %s195, 2
        %s197 = scalar_lea.vmem %s1, %s196
        %s198 = smul.u32 2, %s18
      $region32: #{_fcnet_spatial.1} parent=23 // pred_fallthru
        _
    $region24: #{_fcnet_spatial.1} parent=5 // pred_fallthru
      _
    %p199 = scmp.le.s32.totalorder 1, %s10
    %p200 = scmp.lt.s32.totalorder %s10, 3
    %p201 = pnand %p199, %p200
    %p202 = pneg %p201
    // Predicated region
    $region33: #{_fcnet_spatial.1} parent=5 // pred_check
      _
    $region34: #{_fcnet_spatial.1} parent=5 // pred_check_branch
      %204 = sbr.rel (%p201) target = $region36
    $region35: #{_fcnet_spatial.1} parent=5 // pred_region
      %s205 = ssub.s32 %s10, 1
      %s206 = smul.u32 2, %s20
      %p207 = scmp.lt.s32.totalorder %s19, 1
      %s208 = scalar_select %p207, %s19, 1
      %p209 = scmp.lt.s32.totalorder %s206, 1
      %s210 = scalar_select %p209, %s206, 1
      %s211 = smul.addr %s208, 2
      %s212 = sadd.s32 %s210, %s211
      %s213 = smul.addr %s212, 4
      %s214 = scalar_lea.vmem %s0, %s213
      %p215 = pneg %p50
      %p216 = pneg %p47
      %s217 = smul.u32 2, %s20
      %p218 = scmp.lt.s32.totalorder %s19, 1
      %s219 = scalar_select %p218, %s19, 1
      %p220 = scmp.lt.s32.totalorder %s217, 1
      %s221 = scalar_select %p220, %s217, 1
      %s222 = smul.addr %s219, 2
      %s223 = sadd.s32 %s221, %s222
      %s224 = smul.addr %s223, 2
      %s225 = scalar_lea.vmem %s1, %s224
      %p226 = pneg %p78
      %p227 = pneg %p75
      %p228 = pneg %p99
      %p229 = pneg %p96
      %p230 = pneg %p120
      %p231 = pneg %p117
      %p232 = pneg %p148
      %p233 = pneg %p145
      %s234 = smul.u32 2, %s20
      %p235 = scmp.lt.s32.totalorder %s19, 1
      %s236 = scalar_select %p235, %s19, 1
      %p237 = scmp.lt.s32.totalorder %s234, 1
      %s238 = scalar_select %p237, %s234, 1
      %s239 = smul.addr %s236, 2
      %s240 = sadd.s32 %s238, %s239
      %s241 = smul.addr %s240, 4
      %s242 = scalar_lea.vmem %s4, %s241
      %s243 = smul.u32 2, %s20
      %p244 = scmp.lt.s32.totalorder %s19, 1
      %s245 = scalar_select %p244, %s19, 1
      %p246 = scmp.lt.s32.totalorder %s243, 1
      %s247 = scalar_select %p246, %s243, 1
      %s248 = smul.addr %s245, 2
      %s249 = sadd.s32 %s247, %s248
      %s250 = smul.addr %s249, 4
      %s251 = scalar_lea.vmem %s0, %s250
      %s252 = smul.u32 2, %s20
      %s253 = smul.u32 2, %s20
      %p254 = scmp.lt.s32.totalorder %s19, 1
      %s255 = scalar_select %p254, %s19, 1
      %p256 = scmp.lt.s32.totalorder %s253, 1
      %s257 = scalar_select %p256, %s253, 1
      %s258 = smul.addr %s255, 2
      %s259 = sadd.s32 %s257, %s258
      %s260 = smul.addr %s259, 2
      %s261 = scalar_lea.vmem %s1, %s260
      %s262 = smul.u32 2, %s20
      %s263 = smul.u32 2, %s20
      %p264 = scmp.lt.s32.totalorder %s19, 1
      %s265 = scalar_select %p264, %s19, 1
      %p266 = scmp.lt.s32.totalorder %s263, 1
      %s267 = scalar_select %p266, %s263, 1
      %s268 = smul.addr %s265, 2
      %s269 = sadd.s32 %s267, %s268
      %s270 = smul.addr %s269, 4
      %s271 = scalar_lea.vmem %s4, %s270
      %s272 = smul.u32 2, %s20
      %v274 = vld [vmem:[%s251] sm:$0xff]
      %v276 = vcombine.high %v274, %v274
      %v278 = vpack.c.bf16 %v274, %v274
      %v279 = vpack.c.bf16 %v276, %v276
      %v280 = vld [vmem:[%s261] sm:$0xf]
      %v283 = vunpack.c.l.s4 1983009808
      %v284 = vunpack.c.0.s8 %v283
      %v285 = vlaneseq
      %v286 = vshrl.u32 %v285, 7
      %v287 = vsub.s32 %v284, %v286
      %v288 = vrot.slane %v280, %v287
      %v289 = vcombine.high %v288, %v288
      %v292 = vpack.c.bf16 %v288, %v288
      %v293 = vpack.c.bf16 %v289, %v289
      %vm294 = vcmask 1041408
      %v297 = vsel %vm294, %v278, 0
      %v299 = vsel %vm294, %v279, 0
      %v305 = vunpack.c.l.b16 %v297
      %v306 = vunpack.c.l.b16 %v299
      %v307 = vunpack.c.h.b16 %v297
      %v308 = vunpack.c.h.b16 %v299
      %v309 = vunpack.c.l.b16 0
      %v310 = vunpack.c.h.b16 0
      %v311 = vunpack.c.l.b16 %v292
      %v312 = vunpack.c.l.b16 %v293
      %v313 = vpack.c.b16 %v306, %v305
      %v314 = vpack.c.b16 %v308, %v307
      %v315 = vpack.c.b16 %v309, %v309
      %v316 = vpack.c.b16 %v310, %v310
      %v317 = vpack.c.b16 %v312, %v311
      %323 = vst [vmem:[#allocation2] sm:$0xff] %v313
      %324 = vst [vmem:[#allocation2 + $0x8] sm:$0xff] %v314
      %325 = vst [vmem:[#allocation2 + $0x10] sm:$0xff] %v315
      %326 = vst [vmem:[#allocation2 + $0x18] sm:$0xff] %v316
      %327 = vst [vmem:[#allocation2 + $0x20] sm:$0x11] %v317
      %v328 = vld [vmem:[%s2] sm:$0xf]
      %v329 = vld [vmem:[%s2 + $0x4] sm:$0xf]
      %v330 = vld [vmem:[%s2 + $0x8] sm:$0xf]
      %v331 = vld [vmem:[%s2 + $0xc] sm:$0xf]
      %v332 = vld [vmem:[%s3] sm:$0xff]
      %v333 = vld [vmem:[%s3 + $0x8] sm:$0xff]
      %v334 = vld [vmem:[%s3 + $0x10] sm:$0xff]
      %v335 = vld [vmem:[%s3 + $0x18] sm:$0xff]
      %v336 = vld [vmem:[#allocation2] sm:$0xff]
      %v337 = vld [vmem:[#allocation2 + $0x8] sm:$0xff]
      %v338 = vld [vmem:[#allocation2 + $0x10] sm:$0xff]
      %v339 = vld [vmem:[#allocation2 + $0x18] sm:$0xff]
      %v340 = vld [vmem:[#allocation2 + $0x20] sm:$0x11]
      %342 = vset.pattern.permute.xlu0 0
      %343 = vperm.xlu0 %342, %v332
      %v344 = vpop.permute.xlu0 %343
      %347 = vset.pattern.permute.xlu0 0
      %348 = vperm.xlu0 %347, %v333
      %v349 = vpop.permute.xlu0 %348
      %352 = vset.pattern.permute.xlu0 0
      %353 = vperm.xlu0 %352, %v334
      %v354 = vpop.permute.xlu0 %353
      %357 = vset.pattern.permute.xlu0 0
      %358 = vperm.xlu0 %357, %v335
      %v359 = vpop.permute.xlu0 %358
      %v365 = vunpack.c.l.b16 %v328
      %v366 = vunpack.c.l.b16 %v329
      %v367 = vunpack.c.l.b16 %v330
      %v368 = vunpack.c.l.b16 %v331
      %v369 = vpack.c.b16 %v366, %v365
      %v370 = vpack.c.b16 %v368, %v367
      %v376 = vunpack.c.l.b16 %v336
      %v377 = vunpack.c.h.b16 %v336
      %v378 = vunpack.c.l.b16 %v337
      %v379 = vunpack.c.h.b16 %v337
      %v380 = vunpack.c.l.b16 %v338
      %v381 = vunpack.c.h.b16 %v338
      %v382 = vunpack.c.l.b16 %v339
      %v383 = vunpack.c.h.b16 %v339
      %v384 = vunpack.c.l.b16 %v340
      %v385 = vunpack.c.h.b16 %v340
      %v386 = vpack.c.b16 %v378, %v376
      %v387 = vpack.c.b16 %v379, %v377
      %v388 = vpack.c.b16 %v382, %v380
      %v389 = vpack.c.b16 %v383, %v381
      %v390 = vpack.c.b16 %v384, %v384
      %v391 = vpack.c.b16 %v385, %v385
      %vm396 = vcmask 277504
      %v398 = vsel %vm396, %v369, 0
      %v401 = vsel %vm396, %v370, 0
      %vm403 = vcmask 1040384
      %v405 = vsel %vm403, %v390, 0
      %v408 = vsel %vm403, %v391, 0
      %410 = vmatprep.subr.bf16.mxu0 0
      %411 = vmatpush1.bf16.msra.mxu0 0
      %412 = vmatprep.subr.bf16.mxu0 0
      %413 = vmatpush1.bf16.msra.mxu0 0
      %414 = vmatprep.subr.bf16.mxu0 0
      %415 = vmatpush1.bf16.msra.mxu0 0
      %416 = vmatprep.subr.bf16.mxu0 0
      %417 = vmatpush1.bf16.msra.mxu0 0
      %418 = vmatprep.subr.bf16.mxu0 0
      %419 = vmatpush1.bf16.msra.mxu0 0
      %420 = vmatprep.subr.bf16.mxu0 %v408
      %421 = vmatpush1.bf16.msra.mxu0 %v405
      %422 = vmatprep.subr.bf16.mxu0 %v389
      %423 = vmatpush1.bf16.msra.mxu0 %v388
      %424 = vmatprep.subr.bf16.mxu0 %v387
      %425 = vmatpush1.bf16.msra.mxu0 %v386
      %426 = vmatprep.subr.bf16.mxu0 0
      %427 = vmatpush2.bf16.msra.mxu0 0
      %428 = vmatprep.subr.bf16.mxu0 0
      %429 = vmatpush2.bf16.msra.mxu0 0
      %430 = vmatprep.subr.bf16.mxu0 0
      %431 = vmatpush2.bf16.msra.mxu0 0
      %432 = vmatprep.subr.bf16.mxu0 0
      %433 = vmatpush2.bf16.msra.mxu0 0
      %434 = vmatprep.subr.bf16.mxu0 0
      %435 = vmatpush2.bf16.msra.mxu0 0
      %436 = vmatprep.subr.bf16.mxu0 0
      %437 = vmatpush2.bf16.msra.mxu0 0
      %438 = vmatprep.subr.bf16.mxu0 0
      %439 = vmatpush2.bf16.msra.mxu0 0
      %440 = vmatprep.subr.bf16.mxu0 0
      %441 = vmatpush2.bf16.msra.mxu0 0
      %442 = vmatprep.mubr.bf16.mxu0 0
      %443 = vmatmul.mubr.bf16.gmra.mxu0 %v398
      %v444 = vpop.f32.mrf.mxu0
      %v445 = vadd.f32 %v344, %v444
      %v446 = vpop.f32.mrf.mxu0
      %v447 = vadd.f32 %v344, %v446
      %v448 = vpop.f32.mrf.mxu0
      %v449 = vadd.f32 %v349, %v448
      %v450 = vpop.f32.mrf.mxu0
      %v451 = vadd.f32 %v349, %v450
      %452 = vmatprep.mubr.bf16.mxu0 0
      %453 = vmatmul.mubr.bf16.gmra.mxu0 %v401
      %v454 = vpop.f32.mrf.mxu0
      %v455 = vadd.f32 %v354, %v454
      %v456 = vpop.f32.mrf.mxu0
      %v457 = vadd.f32 %v354, %v456
      %v458 = vpop.f32.mrf.mxu0
      %v459 = vadd.f32 %v359, %v458
      %v460 = vpop.f32.mrf.mxu0
      %v461 = vadd.f32 %v359, %v460
      %462 = vdwg.mxu0
      %v463 = vmax.f32 %v445, 0.0
      %v464 = vmax.f32 %v447, 0.0
      %v465 = vmax.f32 %v449, 0.0
      %v466 = vmax.f32 %v451, 0.0
      %v467 = vmax.f32 %v455, 0.0
      %v468 = vmax.f32 %v457, 0.0
      %v469 = vmax.f32 %v459, 0.0
      %v470 = vmax.f32 %v461, 0.0
      %v471 = vpack.c.bf16 %v465, %v463
      %v472 = vpack.c.bf16 %v466, %v464
      %v473 = vpack.c.bf16 %v469, %v467
      %v474 = vpack.c.bf16 %v470, %v468
      %v479 = vunpack.c.l.b16 %v471
      %v480 = vunpack.c.l.b16 %v472
      %v481 = vunpack.c.h.b16 %v471
      %v482 = vunpack.c.h.b16 %v472
      %v483 = vunpack.c.l.b16 %v473
      %v484 = vunpack.c.l.b16 %v474
      %v485 = vunpack.c.h.b16 %v473
      %v486 = vunpack.c.h.b16 %v474
      %v487 = vpack.c.b16 %v480, %v479
      %v488 = vpack.c.b16 %v482, %v481
      %v489 = vpack.c.b16 %v484, %v483
      %v490 = vpack.c.b16 %v486, %v485
      %495 = vst [vmem:[#allocation2] sm:$0xff] %v487
      %496 = vst [vmem:[#allocation2 + $0x8] sm:$0xff] %v488
      %497 = vst [vmem:[#allocation2 + $0x10] sm:$0xff] %v489
      %498 = vst [vmem:[#allocation2 + $0x18] sm:$0xff] %v490
      %v499 = vld [vmem:[%s2 + $0x10] sm:$0xf]
      %v500 = vld [vmem:[%s2 + $0x14] sm:$0xf]
      %v501 = vld [vmem:[%s2 + $0x18] sm:$0xf]
      %v502 = vld [vmem:[%s2 + $0x1c] sm:$0xf]
      %v503 = vld [vmem:[%s3 + $0x20] sm:$0xff]
      %v504 = vld [vmem:[%s3 + $0x28] sm:$0xff]
      %v505 = vld [vmem:[%s3 + $0x30] sm:$0xff]
      %v506 = vld [vmem:[%s3 + $0x38] sm:$0xff]
      %v507 = vld [vmem:[#allocation2] sm:$0xff]
      %v508 = vld [vmem:[#allocation2 + $0x8] sm:$0xff]
      %v509 = vld [vmem:[#allocation2 + $0x10] sm:$0xff]
      %v510 = vld [vmem:[#allocation2 + $0x18] sm:$0xff]
      %v511 = vld [vmem:[#allocation2 + $0x20] sm:$0x11]
      %513 = vset.pattern.permute.xlu0 0
      %514 = vperm.xlu0 %513, %v503
      %v515 = vpop.permute.xlu0 %514
      %518 = vset.pattern.permute.xlu0 0
      %519 = vperm.xlu0 %518, %v504
      %v520 = vpop.permute.xlu0 %519
      %523 = vset.pattern.permute.xlu0 0
      %524 = vperm.xlu0 %523, %v505
      %v525 = vpop.permute.xlu0 %524
      %528 = vset.pattern.permute.xlu0 0
      %529 = vperm.xlu0 %528, %v506
      %v530 = vpop.permute.xlu0 %529
      %v536 = vunpack.c.l.b16 %v499
      %v537 = vunpack.c.l.b16 %v500
      %v538 = vunpack.c.l.b16 %v501
      %v539 = vunpack.c.l.b16 %v502
      %v540 = vpack.c.b16 %v537, %v536
      %v541 = vpack.c.b16 %v539, %v538
      %v547 = vunpack.c.l.b16 %v507
      %v548 = vunpack.c.h.b16 %v507
      %v549 = vunpack.c.l.b16 %v508
      %v550 = vunpack.c.h.b16 %v508
      %v551 = vunpack.c.l.b16 %v509
      %v552 = vunpack.c.h.b16 %v509
      %v553 = vunpack.c.l.b16 %v510
      %v554 = vunpack.c.h.b16 %v510
      %v555 = vunpack.c.l.b16 %v511
      %v556 = vunpack.c.h.b16 %v511
      %v557 = vpack.c.b16 %v549, %v547
      %v558 = vpack.c.b16 %v550, %v548
      %v559 = vpack.c.b16 %v553, %v551
      %v560 = vpack.c.b16 %v554, %v552
      %v561 = vpack.c.b16 %v555, %v555
      %v562 = vpack.c.b16 %v556, %v556
      %v568 = vsel %vm396, %v540, 0
      %v571 = vsel %vm396, %v541, 0
      %v574 = vsel %vm403, %v561, 0
      %v577 = vsel %vm403, %v562, 0
      %579 = vmatprep.subr.bf16.mxu0 0
      %580 = vmatpush1.bf16.msra.mxu0 0
      %581 = vmatprep.subr.bf16.mxu0 0
      %582 = vmatpush1.bf16.msra.mxu0 0
      %583 = vmatprep.subr.bf16.mxu0 0
      %584 = vmatpush1.bf16.msra.mxu0 0
      %585 = vmatprep.subr.bf16.mxu0 0
      %586 = vmatpush1.bf16.msra.mxu0 0
      %587 = vmatprep.subr.bf16.mxu0 0
      %588 = vmatpush1.bf16.msra.mxu0 0
      %589 = vmatprep.subr.bf16.mxu0 %v577
      %590 = vmatpush1.bf16.msra.mxu0 %v574
      %591 = vmatprep.subr.bf16.mxu0 %v560
      %592 = vmatpush1.bf16.msra.mxu0 %v559
      %593 = vmatprep.subr.bf16.mxu0 %v558
      %594 = vmatpush1.bf16.msra.mxu0 %v557
      %595 = vmatprep.subr.bf16.mxu0 0
      %596 = vmatpush2.bf16.msra.mxu0 0
      %597 = vmatprep.subr.bf16.mxu0 0
      %598 = vmatpush2.bf16.msra.mxu0 0
      %599 = vmatprep.subr.bf16.mxu0 0
      %600 = vmatpush2.bf16.msra.mxu0 0
      %601 = vmatprep.subr.bf16.mxu0 0
      %602 = vmatpush2.bf16.msra.mxu0 0
      %603 = vmatprep.subr.bf16.mxu0 0
      %604 = vmatpush2.bf16.msra.mxu0 0
      %605 = vmatprep.subr.bf16.mxu0 0
      %606 = vmatpush2.bf16.msra.mxu0 0
      %607 = vmatprep.subr.bf16.mxu0 0
      %608 = vmatpush2.bf16.msra.mxu0 0
      %609 = vmatprep.subr.bf16.mxu0 0
      %610 = vmatpush2.bf16.msra.mxu0 0
      %611 = vmatprep.mubr.bf16.mxu0 0
      %612 = vmatmul.mubr.bf16.gmra.mxu0 %v568
      %v613 = vpop.f32.mrf.mxu0
      %v614 = vadd.f32 %v515, %v613
      %v615 = vpop.f32.mrf.mxu0
      %v616 = vadd.f32 %v515, %v615
      %v617 = vpop.f32.mrf.mxu0
      %v618 = vadd.f32 %v520, %v617
      %v619 = vpop.f32.mrf.mxu0
      %v620 = vadd.f32 %v520, %v619
      %621 = vmatprep.mubr.bf16.mxu0 0
      %622 = vmatmul.mubr.bf16.gmra.mxu0 %v571
      %v623 = vpop.f32.mrf.mxu0
      %v624 = vadd.f32 %v525, %v623
      %v625 = vpop.f32.mrf.mxu0
      %v626 = vadd.f32 %v525, %v625
      %v627 = vpop.f32.mrf.mxu0
      %v628 = vadd.f32 %v530, %v627
      %v629 = vpop.f32.mrf.mxu0
      %v630 = vadd.f32 %v530, %v629
      %631 = vdwg.mxu0
      %v632 = vmax.f32 %v614, 0.0
      %v633 = vmax.f32 %v616, 0.0
      %v634 = vmax.f32 %v618, 0.0
      %v635 = vmax.f32 %v620, 0.0
      %v636 = vmax.f32 %v624, 0.0
      %v637 = vmax.f32 %v626, 0.0
      %v638 = vmax.f32 %v628, 0.0
      %v639 = vmax.f32 %v630, 0.0
      %v640 = vpack.c.bf16 %v634, %v632
      %v641 = vpack.c.bf16 %v635, %v633
      %v642 = vpack.c.bf16 %v638, %v636
      %v643 = vpack.c.bf16 %v639, %v637
      %v648 = vunpack.c.l.b16 %v640
      %v649 = vunpack.c.l.b16 %v641
      %v650 = vunpack.c.h.b16 %v640
      %v651 = vunpack.c.h.b16 %v641
      %v652 = vunpack.c.l.b16 %v642
      %v653 = vunpack.c.l.b16 %v643
      %v654 = vunpack.c.h.b16 %v642
      %v655 = vunpack.c.h.b16 %v643
      %v656 = vpack.c.b16 %v649, %v648
      %v657 = vpack.c.b16 %v651, %v650
      %v658 = vpack.c.b16 %v653, %v652
      %v659 = vpack.c.b16 %v655, %v654
      %664 = vst [vmem:[#allocation2] sm:$0xff] %v656
      %665 = vst [vmem:[#allocation2 + $0x8] sm:$0xff] %v657
      %666 = vst [vmem:[#allocation2 + $0x10] sm:$0xff] %v658
      %667 = vst [vmem:[#allocation2 + $0x18] sm:$0xff] %v659
      %v668 = vld [vmem:[%s2 + $0x20] sm:$0x3]
      %v669 = vld [vmem:[%s3 + $0x40] sm:$0x7]
      %v670 = vld [vmem:[#allocation2] sm:$0xff]
      %v671 = vld [vmem:[#allocation2 + $0x8] sm:$0xff]
      %v672 = vld [vmem:[#allocation2 + $0x10] sm:$0xff]
      %v673 = vld [vmem:[#allocation2 + $0x18] sm:$0xff]
      %v674 = vld [vmem:[#allocation2 + $0x20] sm:$0x11]
      %676 = vset.pattern.permute.xlu0 0
      %677 = vperm.xlu0 %676, %v669
      %v678 = vpop.permute.xlu0 %677
      %v685 = vunpack.c.l.b16 %v670
      %v686 = vunpack.c.h.b16 %v670
      %v687 = vunpack.c.l.b16 %v671
      %v688 = vunpack.c.h.b16 %v671
      %v689 = vunpack.c.l.b16 %v672
      %v690 = vunpack.c.h.b16 %v672
      %v691 = vunpack.c.l.b16 %v673
      %v692 = vunpack.c.h.b16 %v673
      %v693 = vunpack.c.l.b16 %v674
      %v694 = vunpack.c.h.b16 %v674
      %v695 = vpack.c.b16 %v687, %v685
      %v696 = vpack.c.b16 %v688, %v686
      %v697 = vpack.c.b16 %v691, %v689
      %v698 = vpack.c.b16 %v692, %v690
      %v699 = vpack.c.b16 %v693, %v693
      %v700 = vpack.c.b16 %v694, %v694
      %v706 = vsel %vm396, %v668, 0
      %v709 = vsel %vm403, %v699, 0
      %v712 = vsel %vm403, %v700, 0
      %714 = vmatprep.subr.bf16.mxu0 0
      %715 = vmatpush1.bf16.msra.mxu0 0
      %716 = vmatprep.subr.bf16.mxu0 0
      %717 = vmatpush1.bf16.msra.mxu0 0
      %718 = vmatprep.subr.bf16.mxu0 0
      %719 = vmatpush1.bf16.msra.mxu0 0
      %720 = vmatprep.subr.bf16.mxu0 0
      %721 = vmatpush1.bf16.msra.mxu0 0
      %722 = vmatprep.subr.bf16.mxu0 0
      %723 = vmatpush1.bf16.msra.mxu0 0
      %724 = vmatprep.subr.bf16.mxu0 %v712
      %725 = vmatpush1.bf16.msra.mxu0 %v709
      %726 = vmatprep.subr.bf16.mxu0 %v698
      %727 = vmatpush1.bf16.msra.mxu0 %v697
      %728 = vmatprep.subr.bf16.mxu0 %v696
      %729 = vmatpush1.bf16.msra.mxu0 %v695
      %730 = vmatprep.subr.bf16.mxu0 0
      %731 = vmatpush2.bf16.msra.mxu0 0
      %732 = vmatprep.subr.bf16.mxu0 0
      %733 = vmatpush2.bf16.msra.mxu0 0
      %734 = vmatprep.subr.bf16.mxu0 0
      %735 = vmatpush2.bf16.msra.mxu0 0
      %736 = vmatprep.subr.bf16.mxu0 0
      %737 = vmatpush2.bf16.msra.mxu0 0
      %738 = vmatprep.subr.bf16.mxu0 0
      %739 = vmatpush2.bf16.msra.mxu0 0
      %740 = vmatprep.subr.bf16.mxu0 0
      %741 = vmatpush2.bf16.msra.mxu0 0
      %742 = vmatprep.subr.bf16.mxu0 0
      %743 = vmatpush2.bf16.msra.mxu0 0
      %744 = vmatprep.subr.bf16.mxu0 0
      %745 = vmatpush2.bf16.msra.mxu0 0
      %746 = vmatprep.mubr.bf16.mxu0 0
      %747 = vmatmul.mubr.bf16.gmra.mxu0 %v706
      %v748 = vpop.f32.mrf.mxu0
      %v749 = vadd.f32 %v678, %v748
      %v750 = vpop.f32.mrf.mxu0
      %v751 = vadd.f32 %v678, %v750
      %v752 = vpop.f32.mrf.mxu0
      %v753 = vpop.f32.mrf.mxu0
      %754 = vdwg.mxu0
      %v757 = vcombine.low %v749, %v751
      %759 = vst [vmem:[%s271] sm:$0x77] %v757
      %s760 = smul.u32 2, %s20
      %p761 = scmp.lt.s32.totalorder %s19, 1
      %s762 = scalar_select %p761, %s19, 1
      %p763 = scmp.lt.s32.totalorder %s760, 1
      %s764 = scalar_select %p763, %s760, 1
      %s765 = smul.addr %s762, 2
      %s766 = sadd.s32 %s764, %s765
      %s767 = smul.addr %s766, 4
      %s768 = scalar_lea.vmem %s4, %s767
      // Predicated region
      $region37: #{_fcnet_spatial.1} parent=35 // pred_check
        %p769 = pneg %p145
      $region38: #{_fcnet_spatial.1} parent=35 // pred_check_branch
        %771 = sbr.rel (%p769) target = $region40
      $region39: #{_fcnet_spatial.1} parent=35 // pred_region
        %s772 = smul.u32 2, %s20
      $region40: #{_fcnet_spatial.1} parent=35 // pred_fallthru
        _
    $region36: #{_fcnet_spatial.1} parent=5 // pred_fallthru
      _
    %p773 = scmp.le.s32.totalorder 2, %s10
    // Predicated region
    $region41: #{_fcnet_spatial.1} parent=5 // pred_check
      %p774 = pneg %p773
    $region42: #{_fcnet_spatial.1} parent=5 // pred_check_branch
      %776 = sbr.rel (%p774) target = $region44
    $region43: #{_fcnet_spatial.1} parent=5 // pred_region
      %s777 = ssub.s32 %s10, 2
      // Predicated region
      $region45: #{_fcnet_spatial.1} parent=43 // pred_check
        %p778 = pneg %p151
      $region46: #{_fcnet_spatial.1} parent=43 // pred_check_branch
        %780 = sbr.rel (%p778) target = $region48
      $region47: #{_fcnet_spatial.1} parent=43 // pred_region
        %s781 = smul.u32 2, %s22
        %p782 = scmp.lt.s32.totalorder %s21, 1
        %s783 = scalar_select %p782, %s21, 1
        %p784 = scmp.lt.s32.totalorder %s781, 1
        %s785 = scalar_select %p784, %s781, 1
        %s786 = smul.addr %s783, 2
        %s787 = sadd.s32 %s785, %s786
        %s788 = smul.addr %s787, 4
        %s789 = scalar_lea.vmem %s4, %s788
      $region48: #{_fcnet_spatial.1} parent=43 // pred_fallthru
        _
    $region44: #{_fcnet_spatial.1} parent=5 // pred_fallthru
      _
  $region6: #{_fcnet_spatial.1} parent=0 // loop_footer
    %s14 = sadd.s32 1, %s10
  $region7: #{_fcnet_spatial.1} parent=0 // loop_footer_branch
    %9 = sbr.rel target = $region3
  $region8: #{_fcnet_spatial.1} parent=0 // loop_exit
    _

</llo_original>
